<compile_context>
chip_gen: v7x
topology: tpu7x:2x2x1
jax: 0.10.0
libtpu: 0.0.40
codegen_flags: <defaults>
</compile_context>

<pallas_src>
import functools

import jax
import jax.numpy as jnp
from jax.experimental import pallas as pl
from jax.experimental.pallas import tpu as pltpu


def _linear_kernel(x_ref, w_ref, b_ref, o_ref):
    # x_ref: (Bt, D), w_ref: (D, C), b_ref: (1, C), o_ref: (Bt, C)
    # MXU matmul with f32 accumulation; bias add in f32 on the VPU; single
    # downcast at the store. Output tile is compact (last dim == C).
    acc = jnp.dot(x_ref[...], w_ref[...], preferred_element_type=jnp.float32)
    o_ref[...] = (acc + b_ref[...]).astype(o_ref.dtype)


@functools.partial(
    jax.jit, static_argnames=("block_b", "small_batch_max", "use_bf16")
)
def classifier_forward(x, w_t, b, block_b=1024, small_batch_max=512, use_bf16=False):
    """x: [B, D], w_t: [D, C] (W transposed), b: [C] -> [B, C]."""
    B, D = x.shape
    D_w, C = w_t.shape
    assert D == D_w, "weight/input dim mismatch"
    out_dtype = x.dtype

    bias2d = jnp.reshape(b, (1, C)).astype(jnp.float32)
    if use_bf16:
        # Halves the dominant x HBM stream; accumulation stays f32 in-kernel.
        x_in = x.astype(jnp.bfloat16)
        w_in = w_t.astype(jnp.bfloat16)
    else:
        x_in = x
        w_in = w_t

    if B <= small_batch_max:
        # Small-batch / launch-latency path: no grid, no pipeline; whole
        # operands resident in VMEM, one MXU call, compact store.
        return pl.pallas_call(
            _linear_kernel,
            out_shape=jax.ShapeDtypeStruct((B, C), out_dtype),
            in_specs=[
                pl.BlockSpec(memory_space=pltpu.MemorySpace.VMEM),
                pl.BlockSpec(memory_space=pltpu.MemorySpace.VMEM),
                pl.BlockSpec(memory_space=pltpu.MemorySpace.VMEM),
            ],
            out_specs=pl.BlockSpec(memory_space=pltpu.MemorySpace.VMEM),
        )(x_in, w_in, bias2d)

    # ---- Large-batch path: tile the batch, keep W/b resident across grid ----
    bb = int(block_b)
    if B <= 2 * bb:
        # Make sure the batch grid has >= 2 steps so it can shard across the
        # two v7x TensorCores; keep the tile 8-row aligned.
        bb = max(256, ((pl.cdiv(B, 2) + 7) // 8) * 8)
    grid_b = pl.cdiv(B, bb)  # no x padding: Pallas masks the partial tail tile

    itemsize_in = x_in.dtype.itemsize
    cost = pl.CostEstimate(
        flops=2 * B * D * C,
        transcendentals=0,
        bytes_accessed=(
            B * D * itemsize_in
            + D * C * itemsize_in
            + C * 4
            + B * C * out_dtype.itemsize
        ),
    )

    return pl.pallas_call(
        _linear_kernel,
        out_shape=jax.ShapeDtypeStruct((B, C), out_dtype),
        grid_spec=pltpu.PrefetchScalarGridSpec(
            num_scalar_prefetch=0,
            grid=(grid_b,),
            in_specs=[
                pl.BlockSpec((bb, D), lambda i: (i, 0)),   # streamed x tiles
                pl.BlockSpec((D, C), lambda i: (0, 0)),    # resident weights
                pl.BlockSpec((1, C), lambda i: (0, 0)),    # resident bias
            ],
            out_specs=pl.BlockSpec((bb, C), lambda i: (i, 0)),  # compact [B, C]
        ),
        compiler_params=pltpu.CompilerParams(
            dimension_semantics=("parallel",),
        ),
        cost_estimate=cost,
    )(x_in, w_in, bias2d)


def init_classifier_params(key, bottleneck_dim, class_num, dtype=jnp.float32):
    """Deterministic init matching init_weights: xavier_normal_ weight, zero bias."""
    # xavier_normal_: std = sqrt(2 / (fan_in + fan_out))
    std = (2.0 / (bottleneck_dim + class_num)) ** 0.5
    w = jax.random.normal(key, (class_num, bottleneck_dim), dtype) * std  # PyTorch [C, D]
    b = jnp.zeros((class_num,), dtype)
    # Store transposed for the kernel's row-major matmul.
    return w.T, b


if __name__ == "__main__":
    class_num = 10
    bottleneck_dim = 256
    batch = 8

    key = jax.random.PRNGKey(0)
    k_x, k_w, k_big = jax.random.split(key, 3)

    x = jax.random.normal(k_x, (batch, bottleneck_dim), jnp.float32)
    w_t, b = init_classifier_params(k_w, bottleneck_dim, class_num)

    # Small-batch (no-grid) path.
    out = jax.block_until_ready(classifier_forward(x, w_t, b))
    ref = x @ w_t + b[None, :]
    assert out.shape == (batch, class_num)
    assert jnp.allclose(out, ref, atol=1e-5, rtol=1e-5)

    # Large-batch gridded path (partial last block, no x padding, compact out).
    x_big = jax.random.normal(k_big, (1500, bottleneck_dim), jnp.float32)
    out_big = jax.block_until_ready(classifier_forward(x_big, w_t, b))
    ref_big = x_big @ w_t + b[None, :]
    assert out_big.shape == (1500, class_num)
    assert jnp.allclose(out_big, ref_big, atol=1e-5, rtol=1e-5)

    # Optional bf16 input/weight path (f32 accumulation), loose tolerance.
    out_bf16 = jax.block_until_ready(classifier_forward(x_big, w_t, b, use_bf16=True))
    assert out_bf16.shape == (1500, class_num)
    assert jnp.allclose(out_bf16, ref_big, atol=1e-1, rtol=1e-1)

    print("KERNEL_OK")
</pallas_src>

<mosaic_0001>
module attributes {stable_mosaic.version = 11 : i64} {
  func.func @_linear_kernel(%arg0: memref<8x256xf32, #tpu.memory_space<vmem>>, %arg1: memref<256x10xf32, #tpu.memory_space<vmem>>, %arg2: memref<1x10xf32, #tpu.memory_space<vmem>>, %arg3: memref<8x10xf32, #tpu.memory_space<vmem>>) attributes {dimension_semantics = [], scalar_prefetch = 0 : i64, scratch_operands = 0 : i64, tpu.core_type = #tpu.core_type<tc>} {
    %c0 = arith.constant 0 : index
    %c0_0 = arith.constant 0 : index
    %0 = vector.load %arg0[%c0, %c0_0] : memref<8x256xf32, #tpu.memory_space<vmem>>, vector<8x256xf32>
    %c0_1 = arith.constant 0 : index
    %c0_2 = arith.constant 0 : index
    %1 = vector.load %arg1[%c0_1, %c0_2] : memref<256x10xf32, #tpu.memory_space<vmem>>, vector<256x10xf32>
    %cst = arith.constant dense<0.000000e+00> : vector<8x10xf32>
    %2 = tpu.matmul %0, %1, %cst {dimension_numbers = #tpu.dot_dimension_numbers<[1], [0], [0], [1], [0, 0, 1, 1], [], []>} : vector<8x256xf32>, vector<256x10xf32>, vector<8x10xf32> -> vector<8x10xf32>
    %c0_3 = arith.constant 0 : index
    %c0_4 = arith.constant 0 : index
    %3 = vector.load %arg2[%c0_3, %c0_4] : memref<1x10xf32, #tpu.memory_space<vmem>>, vector<1x10xf32>
    %4 = vector.broadcast %3 : vector<1x10xf32> to vector<8x10xf32>
    %5 = arith.addf %2, %4 : vector<8x10xf32>
    %c0_5 = arith.constant 0 : index
    %c0_6 = arith.constant 0 : index
    %6 = vector.load %arg3[%c0_5, %c0_6] : memref<8x10xf32, #tpu.memory_space<vmem>>, vector<8x10xf32>
    tpu.vector_store %arg3[%c0_5, %c0_6], %5 {strides = array<i32>} : memref<8x10xf32, #tpu.memory_space<vmem>>, vector<8x10xf32>,
    return
  }
}

</mosaic_0001>

<llo_original>
// kernel: classifier_forward.1
$region0: #{classifier_forward.1}
  #allocation0 [shape = 'u32[]', space=smem, size = 0x4, offset = 0x4, fixed_abs, tag = 'smem constant byte address 0x4 - core index']
  #allocation1 [shape = 'u32[144,128]{1,0:T(1,128)}', space=vmem, size = 0x12000, scoped, tag = 'internal scratch']
  %s0 = inlined_call_operand.vmem [shape: f32[8,256], index: 0, kind: input, shape index: {}]
  %s1 = inlined_call_operand.vmem [shape: f32[256,10], index: 1, kind: input, shape index: {}]
  %s2 = inlined_call_operand.vmem [shape: f32[1,10], index: 2, kind: input, shape index: {}]
  %s3 = inlined_call_operand.hbm [shape: f32[8,10], index: 3, kind: output, shape index: {}]
  %s4 = sld [smem:[#allocation0]]
  $region22: #{classifier_forward.1} parent=0
    _
  %s6 = ssub.s32 1, %s4
  %s7 = scalar_select 0, %s6, %s4
  $region1: #{classifier_forward.1} parent=0
    #allocation2 [shape = 'u8[4096]{0}', space=vmem, size = 0x1000, scoped, tag = 'output window, operand 0, single buffered']
    #allocation3 [shape = 's32[1]{0}', space=sflag, size = 0x4, scoped, tag = 'scoped memory for classifier_forward.1']
    %8 = vsyncpa [#allocation3], 0
    // Predicated region
    $region2: #{classifier_forward.1} parent=1 // pred_check
      _
    $region3: #{classifier_forward.1} parent=1 // pred_check_branch
      %10 = sbr.rel (0) target = $region5
    $region4: #{classifier_forward.1} parent=1 // pred_region
      _
    $region5: #{classifier_forward.1} parent=1 // pred_fallthru
      _
    // Predicated region
    $region6: #{classifier_forward.1} parent=1 // pred_check
      _
    $region7: #{classifier_forward.1} parent=1 // pred_check_branch
      %12 = sbr.rel (0) target = $region9
    $region8: #{classifier_forward.1} parent=1 // pred_region
      _
    $region9: #{classifier_forward.1} parent=1 // pred_fallthru
      _
    // Predicated region
    $region10: #{classifier_forward.1} parent=1 // pred_check
      _
    $region11: #{classifier_forward.1} parent=1 // pred_check_branch
      %14 = sbr.rel (0) target = $region13
    $region12: #{classifier_forward.1} parent=1 // pred_region
      _
    $region13: #{classifier_forward.1} parent=1 // pred_fallthru
      _
    %v15 = vld [vmem:[%s0] sm:$0xff]
    %v16 = vld [vmem:[%s0 + $0x8] sm:$0xff]
    %v17 = vld [vmem:[%s1] sm:$0xff]
    %v18 = vld [vmem:[%s1 + $0x8] sm:$0xff]
    %v19 = vld [vmem:[%s1 + $0x10] sm:$0xff]
    %v20 = vld [vmem:[%s1 + $0x18] sm:$0xff]
    %v21 = vld [vmem:[%s1 + $0x20] sm:$0xff]
    %v22 = vld [vmem:[%s1 + $0x28] sm:$0xff]
    %v23 = vld [vmem:[%s1 + $0x30] sm:$0xff]
    %v24 = vld [vmem:[%s1 + $0x38] sm:$0xff]
    %v25 = vld [vmem:[%s1 + $0x40] sm:$0xff]
    %v26 = vld [vmem:[%s1 + $0x48] sm:$0xff]
    %v27 = vld [vmem:[%s1 + $0x50] sm:$0xff]
    %v28 = vld [vmem:[%s1 + $0x58] sm:$0xff]
    %v29 = vld [vmem:[%s1 + $0x60] sm:$0xff]
    %v30 = vld [vmem:[%s1 + $0x68] sm:$0xff]
    %v31 = vld [vmem:[%s1 + $0x70] sm:$0xff]
    %v32 = vld [vmem:[%s1 + $0x78] sm:$0xff]
    %v33 = vld [vmem:[%s1 + $0x80] sm:$0xff]
    %v34 = vld [vmem:[%s1 + $0x88] sm:$0xff]
    %v35 = vld [vmem:[%s1 + $0x90] sm:$0xff]
    %v36 = vld [vmem:[%s1 + $0x98] sm:$0xff]
    %v37 = vld [vmem:[%s1 + $0xa0] sm:$0xff]
    %v38 = vld [vmem:[%s1 + $0xa8] sm:$0xff]
    %v39 = vld [vmem:[%s1 + $0xb0] sm:$0xff]
    %v40 = vld [vmem:[%s1 + $0xb8] sm:$0xff]
    %v41 = vld [vmem:[%s1 + $0xc0] sm:$0xff]
    %v42 = vld [vmem:[%s1 + $0xc8] sm:$0xff]
    %v43 = vld [vmem:[%s1 + $0xd0] sm:$0xff]
    %v44 = vld [vmem:[%s1 + $0xd8] sm:$0xff]
    %v45 = vld [vmem:[%s1 + $0xe0] sm:$0xff]
    %v46 = vld [vmem:[%s1 + $0xe8] sm:$0xff]
    %v47 = vld [vmem:[%s1 + $0xf0] sm:$0xff]
    %v48 = vld [vmem:[%s1 + $0xf8] sm:$0xff]
    %v49 = vld [vmem:[%s2] sm:$0x1]
    %v51 = vlaneseq
    %v52 = vshrl.u32 %v51, 7
    %v53 = vsub.s32 0, %v52
    %v54 = vrot.slane %v49, %v53
    %56 = vmatprep.subr.mxu0 0.0
    %57 = vmatpush1.msra.mxu0 %v17
    %58 = vmatprep.subr.mxu0 0.0
    %59 = vmatpush1.msra.mxu0 %v18
    %60 = vmatprep.subr.mxu0 0.0
    %61 = vmatpush1.msra.mxu0 %v19
    %62 = vmatprep.subr.mxu0 0.0
    %63 = vmatpush1.msra.mxu0 %v20
    %64 = vmatprep.subr.mxu0 0.0
    %65 = vmatpush1.msra.mxu0 %v21
    %66 = vmatprep.subr.mxu0 0.0
    %67 = vmatpush1.msra.mxu0 %v22
    %68 = vmatprep.subr.mxu0 0.0
    %69 = vmatpush1.msra.mxu0 %v23
    %70 = vmatprep.subr.mxu0 0.0
    %71 = vmatpush1.msra.mxu0 %v24
    %72 = vmatprep.subr.mxu0 0.0
    %73 = vmatpush1.msra.mxu0 %v25
    %74 = vmatprep.subr.mxu0 0.0
    %75 = vmatpush1.msra.mxu0 %v26
    %76 = vmatprep.subr.mxu0 0.0
    %77 = vmatpush1.msra.mxu0 %v27
    %78 = vmatprep.subr.mxu0 0.0
    %79 = vmatpush1.msra.mxu0 %v28
    %80 = vmatprep.subr.mxu0 0.0
    %81 = vmatpush1.msra.mxu0 %v29
    %82 = vmatprep.subr.mxu0 0.0
    %83 = vmatpush1.msra.mxu0 %v30
    %84 = vmatprep.subr.mxu0 0.0
    %85 = vmatpush1.msra.mxu0 %v31
    %86 = vmatprep.subr.mxu0 0.0
    %87 = vmatpush1.msra.mxu0 %v32
    %88 = vmatprep.subr.mxu0 0.0
    %89 = vmatpush1.msra.mxu0 %v33
    %90 = vmatprep.subr.mxu0 0.0
    %91 = vmatpush1.msra.mxu0 %v34
    %92 = vmatprep.subr.mxu0 0.0
    %93 = vmatpush1.msra.mxu0 %v35
    %94 = vmatprep.subr.mxu0 0.0
    %95 = vmatpush1.msra.mxu0 %v36
    %96 = vmatprep.subr.mxu0 0.0
    %97 = vmatpush1.msra.mxu0 %v37
    %98 = vmatprep.subr.mxu0 0.0
    %99 = vmatpush1.msra.mxu0 %v38
    %100 = vmatprep.subr.mxu0 0.0
    %101 = vmatpush1.msra.mxu0 %v39
    %102 = vmatprep.subr.mxu0 0.0
    %103 = vmatpush1.msra.mxu0 %v40
    %104 = vmatprep.subr.mxu0 0.0
    %105 = vmatpush1.msra.mxu0 %v41
    %106 = vmatprep.subr.mxu0 0.0
    %107 = vmatpush1.msra.mxu0 %v42
    %108 = vmatprep.subr.mxu0 0.0
    %109 = vmatpush1.msra.mxu0 %v43
    %110 = vmatprep.subr.mxu0 0.0
    %111 = vmatpush1.msra.mxu0 %v44
    %112 = vmatprep.subr.mxu0 0.0
    %113 = vmatpush1.msra.mxu0 %v45
    %114 = vmatprep.subr.mxu0 0.0
    %115 = vmatpush1.msra.mxu0 %v46
    %116 = vmatprep.subr.mxu0 0.0
    %117 = vmatpush1.msra.mxu0 %v47
    %118 = vmatprep.subr.mxu0 0.0
    %119 = vmatpush1.msra.mxu0 %v48
    %120 = vmatprep.mubr.f32.mxu0 %v16
    %121 = vmatmul.mubr.f32.gmra.mrb[0].mxu0 %v15
    %v122 = vpop.f32.mrb[0].mxu0
    %v123 = vadd.f32 %v54, %v122
    %v124 = vpop.f32.mrb[0].mxu0
    %125 = vdwg.mxu0
    %vm126 = vcmask 80896
    %127 = vst.msk [vmem:[#allocation2] sm:$0xff] %vm126, %v123
    // Predicated region
    $region14: #{classifier_forward.1} parent=1 // pred_check
      _
    $region15: #{classifier_forward.1} parent=1 // pred_check_branch
      %129 = sbr.rel (0) target = $region17
    $region16: #{classifier_forward.1} parent=1 // pred_region
      %s131 = ssub.s32 128, 128
      %132 = vsyncadd [#allocation3], %s131
      %s134 = sshll.u32 [#allocation2], 4
      %s135 = int_to_ptr.vmem [resolvable:$true] %s134
      %137 = dma.vmem_to_hbm [thread:$0]  %s135, 128, %s3, [#allocation3]
    $region17: #{classifier_forward.1} parent=1 // pred_fallthru
      _
    // Predicated region
    $region18: #{classifier_forward.1} parent=1 // pred_check
      _
    $region19: #{classifier_forward.1} parent=1 // pred_check_branch
      %139 = sbr.rel (0) target = $region21
    $region20: #{classifier_forward.1} parent=1 // pred_region
      %140 = dma.done [#allocation3], 128
    $region21: #{classifier_forward.1} parent=1 // pred_fallthru
      _
    %141 = vsyncpa [#allocation3], 1

</llo_original>
